<compile_context>
chip_gen: v5e
topology: v5e:2x2
jax: 0.10.0
libtpu: 0.0.40
codegen_flags: <defaults>
</compile_context>

<pallas_src>
import functools

import jax
import jax.numpy as jnp
from jax import lax
from jax.experimental import pallas as pl
from jax.experimental.pallas import tpu as pltpu


def _merged_weight_kernel(masks_ref, x_ref, w0_ref, w1_ref, b0_ref, b1_ref, o_ref,
                          mw_ref, mb_ref):
    """grid = (N_tiles, M_tiles); N outer / M inner.

    Weight tiles arrive MXU-friendly as (K, tn).  The mask-merged weight and bias tiles
    are built once per N tile (at m == 0) into VMEM scratch and reused for every batch
    tile of the inner M sweep.
    """
    @pl.when(pl.program_id(1) == 0)
    def _():
        mw_ref[...] = (masks_ref[0] * w0_ref[...]
                       + masks_ref[1] * w1_ref[...]).astype(mw_ref.dtype)
        mb_ref[...] = masks_ref[2] * b0_ref[...] + masks_ref[3] * b1_ref[...]

    # y = x @ merged_W   (x: (tm, K), merged_W: (K, tn)) -- canonical MXU feed.
    y = lax.dot_general(
        x_ref[...], mw_ref[...],
        dimension_numbers=(((1,), (0,)), ((), ())),
        preferred_element_type=jnp.float32,
    )
    o_ref[...] = (y + mb_ref[...]).astype(o_ref.dtype)


def _output_merge_kernel(masks_ref, x_ref, w0_ref, w1_ref, b0_ref, b1_ref, o_ref):
    """Small-batch path: combine in output space (O(tm*tn) VPU work), no weight merge."""
    y0 = lax.dot_general(x_ref[...], w0_ref[...],
                         dimension_numbers=(((1,), (0,)), ((), ())),
                         preferred_element_type=jnp.float32)
    y1 = lax.dot_general(x_ref[...], w1_ref[...],
                         dimension_numbers=(((1,), (0,)), ((), ())),
                         preferred_element_type=jnp.float32)
    merged_b = masks_ref[2] * b0_ref[...] + masks_ref[3] * b1_ref[...]
    o_ref[...] = (masks_ref[0] * y0 + masks_ref[1] * y1 + merged_b).astype(o_ref.dtype)


def _constrain(params, constrain_mode):
    if constrain_mode == "identity":
        return params
    if constrain_mode == "01":
        return jax.nn.sigmoid(params)
    if constrain_mode == "-11":
        return jnp.tanh(params)
    if constrain_mode == "cosine":
        return 0.5 - jnp.cos(jnp.pi * params) / 2
    if constrain_mode == "sum1":
        return params / jnp.sum(params)
    # TODO(synk): 'spherical' (SLERP) constraint needs component-weight dot/theta
    # statistics; omitted for the scalar-mask configuration.
    raise ValueError(f"unsupported constrain_mode {constrain_mode}")


def _round_up(v, m):
    return ((v + m - 1) // m) * m


def _pad_axis(arr, axis, target):
    cur = arr.shape[axis]
    if cur == target:
        return arr
    pad = [(0, 0)] * arr.ndim
    pad[axis] = (0, target - cur)
    return jnp.pad(arr, pad)


def linears_with_masks_forward(x, w0, w1, b0, b1, weight_mask_params, bias_mask_params,
                               *, constrain_mode="01", tn=256, tm=256,
                               small_m_threshold=64, force_output_space_merge=None):
    """Pallas implementation of LinearsWithMasks.forward for 2 linear layers with
    scalar weight/bias masks.  Weights in torch nn.Linear layout (N, K)."""
    M, K = x.shape
    N, K2 = w0.shape
    assert K == K2 and w1.shape == (N, K)
    assert b0.shape == (N,) and b1.shape == (N,)

    # --- tile sizes / padded extents ((8, 128) layout constraint) ---
    tm = max(8, min(int(tm), _round_up(M, 8)))
    tm = _round_up(tm, 8)
    M_pad = _round_up(M, tm)

    tn = max(128, min(int(tn), _round_up(N, 128)))
    tn = _round_up(tn, 128)
    N_pad = _round_up(N, tn)

    # --- Constrainer (glue; operates on the tiny mask parameters only) ---
    wm = _constrain(weight_mask_params.astype(jnp.float32), constrain_mode)
    bm = _constrain(bias_mask_params.astype(jnp.float32), constrain_mode)
    masks = jnp.concatenate([wm, bm])                        # (4,) f32, lives in SMEM

    # Pre-transpose weights once so the kernel sees the canonical (K, N) MXU feed.
    w0_t = _pad_axis(jnp.transpose(w0), 1, N_pad)            # (K, N_pad)
    w1_t = _pad_axis(jnp.transpose(w1), 1, N_pad)
    b0_2d = _pad_axis(b0.reshape(1, N).astype(jnp.float32), 1, N_pad)
    b1_2d = _pad_axis(b1.reshape(1, N).astype(jnp.float32), 1, N_pad)
    x_p = _pad_axis(x, 0, M_pad)

    if force_output_space_merge is None:
        use_output_merge = M <= small_m_threshold
    else:
        use_output_merge = bool(force_output_space_merge)

    n_tiles = N_pad // tn
    m_tiles = M_pad // tm
    grid = (n_tiles, m_tiles)                                # N outer, M inner

    in_specs = [
        pl.BlockSpec(memory_space=pltpu.SMEM),               # masks (4,)
        pl.BlockSpec((tm, K), lambda n, m: (m, 0)),          # x tile
        pl.BlockSpec((K, tn), lambda n, m: (0, n)),          # W0^T tile (K, tn)
        pl.BlockSpec((K, tn), lambda n, m: (0, n)),          # W1^T tile (K, tn)
        pl.BlockSpec((1, tn), lambda n, m: (0, n)),          # b0 tile
        pl.BlockSpec((1, tn), lambda n, m: (0, n)),          # b1 tile
    ]
    out_specs = pl.BlockSpec((tm, tn), lambda n, m: (m, n))

    itemsize = jnp.dtype(x.dtype).itemsize

    # Explicit VMEM budget (double-buffered inputs/output + scratch) with headroom,
    # capped at 64 MiB so the same config is valid on v7x's smaller VMEM.
    vmem_bytes = (
        2 * 2 * K * tn * itemsize                            # two weight tiles, dbl-buffered
        + 2 * tm * K * itemsize                              # x tile, dbl-buffered
        + 2 * tm * tn * itemsize                             # out tile, dbl-buffered
        + 2 * 2 * tn * 4                                     # bias tiles, dbl-buffered, f32
        + (0 if use_output_merge else (K * tn * itemsize + tn * 4))  # merged W/b scratch
    )
    vmem_limit = int(min(max(2 * vmem_bytes, 16 * 1024 * 1024), 64 * 1024 * 1024))

    if use_output_merge:
        flops = 4 * M_pad * N_pad * K + 4 * M_pad * N_pad
    else:
        flops = 2 * M_pad * N_pad * K + 3 * N_pad * K + M_pad * N_pad
    cost = pl.CostEstimate(
        flops=int(flops),
        transcendentals=0,
        bytes_accessed=int(itemsize * (2 * N_pad * K + M_pad * K + M_pad * N_pad)
                           + 4 * 2 * N_pad),
    )

    if use_output_merge:
        kernel = _output_merge_kernel
        scratch_shapes = []
        dim_sem = ("parallel", "parallel")
    else:
        # TODO(synk): for very large K, add a K reduction grid axis (marked "arbitrary")
        # with an f32 accumulator instead of loading the full-K weight tile at once.
        kernel = _merged_weight_kernel
        scratch_shapes = [pltpu.VMEM((K, tn), x.dtype),       # merged weight tile
                          pltpu.VMEM((1, tn), jnp.float32)]   # merged bias tile
        # M axis must be "arbitrary": the merged-weight scratch is filled at m == 0
        # and reused by later m steps of the same N tile.
        dim_sem = ("parallel", "arbitrary")

    out = pl.pallas_call(
        kernel,
        out_shape=jax.ShapeDtypeStruct((M_pad, N_pad), x.dtype),
        grid=grid,
        in_specs=in_specs,
        out_specs=out_specs,
        scratch_shapes=scratch_shapes,
        compiler_params=pltpu.CompilerParams(
            dimension_semantics=dim_sem,
            vmem_limit_bytes=vmem_limit,
        ),
        cost_estimate=cost,
    )(masks, x_p, w0_t, w1_t, b0_2d, b1_2d)

    if (M_pad, N_pad) != (M, N):
        out = out[:M, :N]
    return out


def _reference(x, w0, w1, b0, b1, wm_params, bm_params, constrain_mode="01"):
    wm = _constrain(wm_params, constrain_mode)
    bm = _constrain(bm_params, constrain_mode)
    merged_w = wm[0] * w0 + wm[1] * w1
    merged_b = bm[0] * b0 + bm[1] * b1
    return x @ merged_w.T + merged_b


if __name__ == "__main__":
    key = jax.random.PRNGKey(0)
    k_x, k_w0, k_w1, k_b0, k_b1 = jax.random.split(key, 5)

    M, K, N = 16, 128, 512          # batch, in_features, out_features

    x = jax.random.normal(k_x, (M, K), dtype=jnp.float32)
    # deterministic nn.Linear-style init (uniform(-1/sqrt(K), 1/sqrt(K)))
    bound = 1.0 / (K ** 0.5)
    w0 = jax.random.uniform(k_w0, (N, K), minval=-bound, maxval=bound, dtype=jnp.float32)
    w1 = jax.random.uniform(k_w1, (N, K), minval=-bound, maxval=bound, dtype=jnp.float32)
    b0 = jax.random.uniform(k_b0, (N,), minval=-bound, maxval=bound, dtype=jnp.float32)
    b1 = jax.random.uniform(k_b1, (N,), minval=-bound, maxval=bound, dtype=jnp.float32)

    # scalar mask parameters (weight_values=[0.3, 0.7], bias_values=[0.3, 0.7])
    weight_mask_params = jnp.array([0.3, 0.7], dtype=jnp.float32)
    bias_mask_params = jnp.array([0.3, 0.7], dtype=jnp.float32)

    y_ref = _reference(x, w0, w1, b0, b1, weight_mask_params, bias_mask_params)

    # Large-batch path: cached merged-weight scratch, grid = (N//tn, M//tm) = (2, 2).
    fwd_merge = jax.jit(functools.partial(
        linears_with_masks_forward, constrain_mode="01",
        tn=256, tm=8, force_output_space_merge=False))
    y_merge = jax.block_until_ready(
        fwd_merge(x, w0, w1, b0, b1, weight_mask_params, bias_mask_params))
    assert y_merge.shape == (M, N)
    assert jnp.allclose(y_merge, y_ref, atol=1e-4, rtol=1e-4), "merged-weight path mismatch"

    # Small-batch path: combine the two matmul outputs in output space, no weight merge.
    fwd_osm = jax.jit(functools.partial(
        linears_with_masks_forward, constrain_mode="01",
        tn=256, force_output_space_merge=True))
    y_osm = jax.block_until_ready(
        fwd_osm(x, w0, w1, b0, b1, weight_mask_params, bias_mask_params))
    assert y_osm.shape == (M, N)
    assert jnp.allclose(y_osm, y_ref, atol=1e-4, rtol=1e-4), "output-merge path mismatch"

    print("KERNEL_OK")
</pallas_src>

<mosaic_0001>
module attributes {stable_mosaic.version = 11 : i64} {
  func.func @_merged_weight_kernel(%arg0: i32, %arg1: i32, %arg2: memref<4xf32, #tpu.memory_space<smem>>, %arg3: memref<8x128xf32, #tpu.memory_space<vmem>>, %arg4: memref<128x256xf32, #tpu.memory_space<vmem>>, %arg5: memref<128x256xf32, #tpu.memory_space<vmem>>, %arg6: memref<1x256xf32, #tpu.memory_space<vmem>>, %arg7: memref<1x256xf32, #tpu.memory_space<vmem>>, %arg8: memref<8x256xf32, #tpu.memory_space<vmem>>, %arg9: memref<128x256xf32, #tpu.memory_space<vmem>>, %arg10: memref<1x256xf32, #tpu.memory_space<vmem>>) attributes {dimension_semantics = [#tpu.dimension_semantics<parallel>, #tpu.dimension_semantics<arbitrary>], iteration_bounds = array<i64: 2, 2>, scalar_prefetch = 0 : i64, scratch_operands = 2 : i64, tpu.core_type = #tpu.core_type<tc>, window_params = [{transform_indices = @transform_0, window_bounds = array<i64: 4>}, {transform_indices = @transform_1, window_bounds = array<i64: 8, 128>}, {transform_indices = @transform_2, window_bounds = array<i64: 128, 256>}, {transform_indices = @transform_3, window_bounds = array<i64: 128, 256>}, {transform_indices = @transform_4, window_bounds = array<i64: 1, 256>}, {transform_indices = @transform_5, window_bounds = array<i64: 1, 256>}, {transform_indices = @transform_6, window_bounds = array<i64: 8, 256>}]} {
    %c0_i32 = arith.constant 0 : i32
    %0 = arith.cmpi eq, %arg1, %c0_i32 : i32
    %1 = arith.extui %0 : i1 to i32
    %c0_i32_0 = arith.constant 0 : i32
    %2 = arith.cmpi ne, %1, %c0_i32_0 : i32
    scf.if %2 {
      %c0_8 = arith.constant 0 : index
      %10 = memref.load %arg2[%c0_8] : memref<4xf32, #tpu.memory_space<smem>>
      %c0_9 = arith.constant 0 : index
      %c0_10 = arith.constant 0 : index
      %11 = vector.load %arg4[%c0_9, %c0_10] : memref<128x256xf32, #tpu.memory_space<vmem>>, vector<128x256xf32>
      %12 = vector.broadcast %10 : f32 to vector<128x256xf32>
      %13 = arith.mulf %12, %11 : vector<128x256xf32>
      %c1 = arith.constant 1 : index
      %14 = memref.load %arg2[%c1] : memref<4xf32, #tpu.memory_space<smem>>
      %c0_11 = arith.constant 0 : index
      %c0_12 = arith.constant 0 : index
      %15 = vector.load %arg5[%c0_11, %c0_12] : memref<128x256xf32, #tpu.memory_space<vmem>>, vector<128x256xf32>
      %16 = vector.broadcast %14 : f32 to vector<128x256xf32>
      %17 = arith.mulf %16, %15 : vector<128x256xf32>
      %18 = arith.addf %13, %17 : vector<128x256xf32>
      %c0_13 = arith.constant 0 : index
      %c0_14 = arith.constant 0 : index
      %19 = vector.load %arg9[%c0_13, %c0_14] : memref<128x256xf32, #tpu.memory_space<vmem>>, vector<128x256xf32>
      tpu.vector_store %arg9[%c0_13, %c0_14], %18 {strides = array<i32>} : memref<128x256xf32, #tpu.memory_space<vmem>>, vector<128x256xf32>,
      %c2 = arith.constant 2 : index
      %20 = memref.load %arg2[%c2] : memref<4xf32, #tpu.memory_space<smem>>
      %c0_15 = arith.constant 0 : index
      %c0_16 = arith.constant 0 : index
      %21 = vector.load %arg6[%c0_15, %c0_16] : memref<1x256xf32, #tpu.memory_space<vmem>>, vector<1x256xf32>
      %22 = vector.broadcast %20 : f32 to vector<1x256xf32>
      %23 = arith.mulf %22, %21 : vector<1x256xf32>
      %c3 = arith.constant 3 : index
      %24 = memref.load %arg2[%c3] : memref<4xf32, #tpu.memory_space<smem>>
      %c0_17 = arith.constant 0 : index
      %c0_18 = arith.constant 0 : index
      %25 = vector.load %arg7[%c0_17, %c0_18] : memref<1x256xf32, #tpu.memory_space<vmem>>, vector<1x256xf32>
      %26 = vector.broadcast %24 : f32 to vector<1x256xf32>
      %27 = arith.mulf %26, %25 : vector<1x256xf32>
      %28 = arith.addf %23, %27 : vector<1x256xf32>
      %c0_19 = arith.constant 0 : index
      %c0_20 = arith.constant 0 : index
      %29 = vector.load %arg10[%c0_19, %c0_20] : memref<1x256xf32, #tpu.memory_space<vmem>>, vector<1x256xf32>
      tpu.vector_store %arg10[%c0_19, %c0_20], %28 {strides = array<i32>} : memref<1x256xf32, #tpu.memory_space<vmem>>, vector<1x256xf32>,
    } else {
    }
    %c0 = arith.constant 0 : index
    %c0_1 = arith.constant 0 : index
    %3 = vector.load %arg3[%c0, %c0_1] : memref<8x128xf32, #tpu.memory_space<vmem>>, vector<8x128xf32>
    %c0_2 = arith.constant 0 : index
    %c0_3 = arith.constant 0 : index
    %4 = vector.load %arg9[%c0_2, %c0_3] : memref<128x256xf32, #tpu.memory_space<vmem>>, vector<128x256xf32>
    %cst = arith.constant dense<0.000000e+00> : vector<8x256xf32>
    %5 = tpu.matmul %3, %4, %cst {dimension_numbers = #tpu.dot_dimension_numbers<[1], [0], [0], [1], [0, 0, 1, 1], [], []>} : vector<8x128xf32>, vector<128x256xf32>, vector<8x256xf32> -> vector<8x256xf32>
    %c0_4 = arith.constant 0 : index
    %c0_5 = arith.constant 0 : index
    %6 = vector.load %arg10[%c0_4, %c0_5] : memref<1x256xf32, #tpu.memory_space<vmem>>, vector<1x256xf32>
    %7 = vector.broadcast %6 : vector<1x256xf32> to vector<8x256xf32>
    %8 = arith.addf %5, %7 : vector<8x256xf32>
    %c0_6 = arith.constant 0 : index
    %c0_7 = arith.constant 0 : index
    %9 = vector.load %arg8[%c0_6, %c0_7] : memref<8x256xf32, #tpu.memory_space<vmem>>, vector<8x256xf32>
    tpu.vector_store %arg8[%c0_6, %c0_7], %8 {strides = array<i32>} : memref<8x256xf32, #tpu.memory_space<vmem>>, vector<8x256xf32>,
    return
  }
  func.func @transform_0(%arg0: i32, %arg1: i32) -> i32 {
    %c0_i32 = arith.constant 0 : i32
    %c0_i32_0 = arith.constant 0 : i32
    return %c0_i32 : i32
  }
  func.func @transform_1(%arg0: i32, %arg1: i32) -> (i32, i32) {
    %c0_i32 = arith.constant 0 : i32
    %c0_i32_0 = arith.constant 0 : i32
    return %arg1, %c0_i32 : i32, i32
  }
  func.func @transform_2(%arg0: i32, %arg1: i32) -> (i32, i32) {
    %c0_i32 = arith.constant 0 : i32
    %c0_i32_0 = arith.constant 0 : i32
    return %c0_i32, %arg0 : i32, i32
  }
  func.func @transform_3(%arg0: i32, %arg1: i32) -> (i32, i32) {
    %c0_i32 = arith.constant 0 : i32
    %c0_i32_0 = arith.constant 0 : i32
    return %c0_i32, %arg0 : i32, i32
  }
  func.func @transform_4(%arg0: i32, %arg1: i32) -> (i32, i32) {
    %c0_i32 = arith.constant 0 : i32
    %c0_i32_0 = arith.constant 0 : i32
    return %c0_i32, %arg0 : i32, i32
  }
  func.func @transform_5(%arg0: i32, %arg1: i32) -> (i32, i32) {
    %c0_i32 = arith.constant 0 : i32
    %c0_i32_0 = arith.constant 0 : i32
    return %c0_i32, %arg0 : i32, i32
  }
  func.func @transform_6(%arg0: i32, %arg1: i32) -> (i32, i32) {
    %c0_i32 = arith.constant 0 : i32
    return %arg1, %arg0 : i32, i32
  }
}

</mosaic_0001>

<llo_original>
// kernel: linears_with_masks_forward.1
$region0: #{linears_with_masks_forward.1}
  #allocation0 [shape = 'u32[]', space=smem, size = 0x4, offset = 0x4, fixed_abs, tag = 'smem constant byte address 0x4 - core index']
  #allocation1 [shape = 'u32[72,128]{1,0:T(1,128)}', space=vmem, size = 0x9000, scoped, tag = 'internal scratch']
  #allocation2 [shape = 'f32[128,256]{1,0:T(8,128)}', space=vmem, size = 0x20000, scoped, tag = 'scratch operand']
  #allocation3 [shape = 'f32[1,256]{1,0:T(1,128)}', space=vmem, size = 0x400, scoped, tag = 'scratch operand']
  %s0 = inlined_call_operand.vmem [shape: f32[4], index: 0, kind: input, shape index: {}]
  %s1 = inlined_call_operand.vmem [shape: f32[16,128], index: 1, kind: input, shape index: {}]
  %s2 = inlined_call_operand.vmem [shape: f32[128,512], index: 2, kind: input, shape index: {}]
  %s3 = inlined_call_operand.vmem [shape: f32[128,512], index: 3, kind: input, shape index: {}]
  %s4 = inlined_call_operand.vmem [shape: f32[1,512], index: 4, kind: input, shape index: {}]
  %s5 = inlined_call_operand.vmem [shape: f32[1,512], index: 5, kind: input, shape index: {}]
  %s6 = inlined_call_operand.hbm [shape: f32[16,512], index: 6, kind: output, shape index: {}]
  %s7 = sld [smem:[#allocation0]]
  $region111: #{linears_with_masks_forward.1} parent=0
    _
  %s9 = ssub.s32 1, %s7
  %s10 = scalar_select 0, %s9, %s7
  $region1: #{linears_with_masks_forward.1} parent=0
    #allocation4 [shape = 'u8[512]{0}', space=smem, size = 0x200, scoped, tag = 'input window, operand 0, single buffered']
    #allocation5 [shape = 's32[2]{0}', space=sflag, size = 0x8, scoped, tag = 'scoped memory for linears_with_masks_forward.1']
    #allocation6 [shape = 's32[2]{0}', space=sflag, size = 0x8, scoped, tag = 'scoped memory for linears_with_masks_forward.1']
    #allocation7 [shape = 'u8[262144]{0}', space=vmem, size = 0x40000, scoped, tag = 'input window, operand 2']
    #allocation8 [shape = 'u8[262144]{0}', space=vmem, size = 0x40000, scoped, tag = 'input window, operand 3']
    #allocation9 [shape = 'u8[16384]{0}', space=vmem, size = 0x4000, scoped, tag = 'output window, operand 0']
    %11 = vsyncpa [#allocation6], 0
    %12 = vsyncpa [#allocation5], 0
    %s13 = scalar_lea.sflag [#allocation5], 1
    %14 = vsyncpa %s13, 0
    loop: start=0, step=1, limit=6
    $region2: #{linears_with_masks_forward.1} parent=1 // loop_pre_header
      _
    $region3: #{linears_with_masks_forward.1} parent=1 // loop_header
      %s16 = sphi 0, %s20
      %p17 = scmp.ge.s32.totalorder %s16, 6
      %s23 = sphi 0, %s35
      %s24 = sphi 0, %s31
      %s25 = sphi 0, %s23
      %s26 = sphi 0, %s24
      %s27 = sphi 0, %s25
      %s28 = sphi 0, %s26
      %s36 = sphi 0, %s36
      %s38 = sphi 0, %s36
      %s39 = sphi 0, %s38
      %s53 = sphi 0, %s39
      %s59 = sphi 0, %s61
      %s62 = sphi 0, %s59
      %s63 = sphi 0, %s62
      %s79 = sphi 0, %s63
      %s85 = sphi 0, %s87
      %s88 = sphi 0, %s85
      %s89 = sphi 0, %s88
      %s105 = sphi 0, %s89
      %s111 = sphi 0, %s113
      %s114 = sphi 0, %s111
      %s115 = sphi 0, %s114
      %s131 = sphi 0, %s115
      %s137 = sphi 0, %s139
      %s140 = sphi 0, %s137
      %s141 = sphi 0, %s140
      %s157 = sphi 0, %s141
      %s163 = sphi 0, %s165
      %s166 = sphi 0, %s163
      %s167 = sphi 0, %s166
      %s183 = sphi 0, %s167
      %s191 = sphi 0, %s193
      %s194 = sphi 0, %s191
      %s195 = sphi 0, %s194
      %s211 = sphi 0, %s195
    $region4: #{linears_with_masks_forward.1} parent=1 // loop_header_branch
      %19 = sbr.rel (%p17) target = $region8
    $region5: #{linears_with_masks_forward.1} parent=1 // loop_body
      %s21 = ssub.s32 %s16, 1
      %s22 = ssub.s32 %s16, 2
      %s29 = sadd.s32 1, %s24
      %p30 = scmp.ge.s32.totalorder %s29, 2
      %s31 = scalar_select %p30, 0, %s29
      %s32 = sadd.s32 1, %s23
      %s33 = scalar_select %p30, %s32, %s23
      %p34 = scmp.ge.s32.totalorder %s33, 2
      %s35 = scalar_select %p34, 0, %s33
      %s37 = sadd.s32 %s36, 1
      %p40 = scmp.eq.s32.totalorder %s16, 3
      %p41 = scmp.ne.s32.totalorder %s36, %s38
      %p42 = scmp.eq.s32.totalorder %s16, 0
      %p43 = por %p41, %p42
      %p44 = scmp.ne.s32.totalorder %s36, %s38
      %p45 = scmp.eq.s32.totalorder %s21, 3
      %p46 = por %p44, %p45
      %p47 = scmp.ne.s32.totalorder %s38, %s39
      %p48 = scmp.eq.s32.totalorder %s21, 0
      %p49 = por %p47, %p48
      %p50 = scmp.ne.s32.totalorder %s38, %s39
      %p51 = scmp.eq.s32.totalorder %s22, 3
      %p52 = por %p50, %p51
      %p54 = scmp.ne.s32.totalorder %s39, %s53
      %p55 = scmp.eq.s32.totalorder %s22, 0
      %p56 = por %p54, %p55
      %s57 = ssub.s32 %s24, %s31
      %p58 = scmp.eq.s32.totalorder %s57, 0
      %s60 = sadd.s32 %s59, 1
      %s61 = scalar_select %p58, %s59, %s60
      %p64 = pneg %p58
      %p65 = scmp.eq.s32.totalorder %s16, 3
      %p66 = por %p64, %p65
      %p67 = scmp.ne.s32.totalorder %s59, %s62
      %p68 = scmp.eq.s32.totalorder %s16, 0
      %p69 = por %p67, %p68
      %p70 = scmp.ne.s32.totalorder %s59, %s62
      %p71 = scmp.eq.s32.totalorder %s21, 3
      %p72 = por %p70, %p71
      %p73 = scmp.ne.s32.totalorder %s62, %s63
      %p74 = scmp.eq.s32.totalorder %s21, 0
      %p75 = por %p73, %p74
      %p76 = scmp.ne.s32.totalorder %s62, %s63
      %p77 = scmp.eq.s32.totalorder %s22, 3
      %p78 = por %p76, %p77
      %p80 = scmp.ne.s32.totalorder %s63, %s79
      %p81 = scmp.eq.s32.totalorder %s22, 0
      %p82 = por %p80, %p81
      %s83 = ssub.s32 %s23, %s35
      %p84 = scmp.eq.s32.totalorder %s83, 0
      %s86 = sadd.s32 %s85, 1
      %s87 = scalar_select %p84, %s85, %s86
      %p90 = pneg %p84
      %p91 = scmp.eq.s32.totalorder %s16, 3
      %p92 = por %p90, %p91
      %p93 = scmp.ne.s32.totalorder %s85, %s88
      %p94 = scmp.eq.s32.totalorder %s16, 0
      %p95 = por %p93, %p94
      %p96 = scmp.ne.s32.totalorder %s85, %s88
      %p97 = scmp.eq.s32.totalorder %s21, 3
      %p98 = por %p96, %p97
      %p99 = scmp.ne.s32.totalorder %s88, %s89
      %p100 = scmp.eq.s32.totalorder %s21, 0
      %p101 = por %p99, %p100
      %p102 = scmp.ne.s32.totalorder %s88, %s89
      %p103 = scmp.eq.s32.totalorder %s22, 3
      %p104 = por %p102, %p103
      %p106 = scmp.ne.s32.totalorder %s89, %s105
      %p107 = scmp.eq.s32.totalorder %s22, 0
      %p108 = por %p106, %p107
      %s109 = ssub.s32 %s23, %s35
      %p110 = scmp.eq.s32.totalorder %s109, 0
      %s112 = sadd.s32 %s111, 1
      %s113 = scalar_select %p110, %s111, %s112
      %p116 = pneg %p110
      %p117 = scmp.eq.s32.totalorder %s16, 3
      %p118 = por %p116, %p117
      %p119 = scmp.ne.s32.totalorder %s111, %s114
      %p120 = scmp.eq.s32.totalorder %s16, 0
      %p121 = por %p119, %p120
      %p122 = scmp.ne.s32.totalorder %s111, %s114
      %p123 = scmp.eq.s32.totalorder %s21, 3
      %p124 = por %p122, %p123
      %p125 = scmp.ne.s32.totalorder %s114, %s115
      %p126 = scmp.eq.s32.totalorder %s21, 0
      %p127 = por %p125, %p126
      %p128 = scmp.ne.s32.totalorder %s114, %s115
      %p129 = scmp.eq.s32.totalorder %s22, 3
      %p130 = por %p128, %p129
      %p132 = scmp.ne.s32.totalorder %s115, %s131
      %p133 = scmp.eq.s32.totalorder %s22, 0
      %p134 = por %p132, %p133
      %s135 = ssub.s32 %s23, %s35
      %p136 = scmp.eq.s32.totalorder %s135, 0
      %s138 = sadd.s32 %s137, 1
      %s139 = scalar_select %p136, %s137, %s138
      %p142 = pneg %p136
      %p143 = scmp.eq.s32.totalorder %s16, 3
      %p144 = por %p142, %p143
      %p145 = scmp.ne.s32.totalorder %s137, %s140
      %p146 = scmp.eq.s32.totalorder %s16, 0
      %p147 = por %p145, %p146
      %p148 = scmp.ne.s32.totalorder %s137, %s140
      %p149 = scmp.eq.s32.totalorder %s21, 3
      %p150 = por %p148, %p149
      %p151 = scmp.ne.s32.totalorder %s140, %s141
      %p152 = scmp.eq.s32.totalorder %s21, 0
      %p153 = por %p151, %p152
      %p154 = scmp.ne.s32.totalorder %s140, %s141
      %p155 = scmp.eq.s32.totalorder %s22, 3
      %p156 = por %p154, %p155
      %p158 = scmp.ne.s32.totalorder %s141, %s157
      %p159 = scmp.eq.s32.totalorder %s22, 0
      %p160 = por %p158, %p159
      %s161 = ssub.s32 %s23, %s35
      %p162 = scmp.eq.s32.totalorder %s161, 0
      %s164 = sadd.s32 %s163, 1
      %s165 = scalar_select %p162, %s163, %s164
      %p168 = pneg %p162
      %p169 = scmp.eq.s32.totalorder %s16, 3
      %p170 = por %p168, %p169
      %p171 = scmp.ne.s32.totalorder %s163, %s166
      %p172 = scmp.eq.s32.totalorder %s16, 0
      %p173 = por %p171, %p172
      %p174 = scmp.ne.s32.totalorder %s163, %s166
      %p175 = scmp.eq.s32.totalorder %s21, 3
      %p176 = por %p174, %p175
      %p177 = scmp.ne.s32.totalorder %s166, %s167
      %p178 = scmp.eq.s32.totalorder %s21, 0
      %p179 = por %p177, %p178
      %p180 = scmp.ne.s32.totalorder %s166, %s167
      %p181 = scmp.eq.s32.totalorder %s22, 3
      %p182 = por %p180, %p181
      %p184 = scmp.ne.s32.totalorder %s167, %s183
      %p185 = scmp.eq.s32.totalorder %s22, 0
      %p186 = por %p184, %p185
      %s187 = ssub.s32 %s24, %s31
      %s188 = ssub.s32 %s23, %s35
      %s189 = sor.u32 %s187, %s188
      %p190 = scmp.eq.s32.totalorder %s189, 0
      %s192 = sadd.s32 %s191, 1
      %s193 = scalar_select %p190, %s191, %s192
      %p196 = pneg %p190
      %p197 = scmp.eq.s32.totalorder %s16, 3
      %p198 = por %p196, %p197
      %p199 = scmp.ne.s32.totalorder %s191, %s194
      %p200 = scmp.eq.s32.totalorder %s16, 0
      %p201 = por %p199, %p200
      %p202 = scmp.ne.s32.totalorder %s191, %s194
      %p203 = scmp.eq.s32.totalorder %s21, 3
      %p204 = por %p202, %p203
      %p205 = scmp.ne.s32.totalorder %s194, %s195
      %p206 = scmp.eq.s32.totalorder %s21, 0
      %p207 = por %p205, %p206
      %p208 = scmp.ne.s32.totalorder %s194, %s195
      %p209 = scmp.eq.s32.totalorder %s22, 3
      %p210 = por %p208, %p209
      %p212 = scmp.ne.s32.totalorder %s195, %s211
      %p213 = scmp.eq.s32.totalorder %s22, 0
      %p214 = por %p212, %p213
      %p215 = scmp.le.s32.totalorder 1, %s16
      %p216 = scmp.lt.s32.totalorder %s16, 5
      %p217 = pnand %p215, %p216
      %p218 = pneg %p217
      // Predicated region
      $region9: #{linears_with_masks_forward.1} parent=5 // pred_check
        _
      $region10: #{linears_with_masks_forward.1} parent=5 // pred_check_branch
        %220 = sbr.rel (%p217) target = $region12
      $region11: #{linears_with_masks_forward.1} parent=5 // pred_region
        %s221 = ssub.s32 %s16, 1
        // Predicated region
        $region13: #{linears_with_masks_forward.1} parent=11 // pred_check
          %p222 = pneg %p49
        $region14: #{linears_with_masks_forward.1} parent=11 // pred_check_branch
          %224 = sbr.rel (%p222) target = $region16
        $region15: #{linears_with_masks_forward.1} parent=11 // pred_region
          %226 = vsyncadd [#allocation6], 0
          %s228 = sshll.u32 %s0, 4
          %s229 = int_to_ptr.vmem [resolvable:$true] %s228
          %231 = dma.vmem_to_smem %s229, 16, [#allocation4], [#allocation6]
        $region16: #{linears_with_masks_forward.1} parent=11 // pred_fallthru
          _
      $region12: #{linears_with_masks_forward.1} parent=5 // pred_fallthru
        _
      %p232 = scmp.lt.s32.totalorder %s16, 4
      // Predicated region
      $region17: #{linears_with_masks_forward.1} parent=5 // pred_check
        %p233 = pneg %p232
      $region18: #{linears_with_masks_forward.1} parent=5 // pred_check_branch
        %235 = sbr.rel (%p233) target = $region20
      $region19: #{linears_with_masks_forward.1} parent=5 // pred_region
        // Predicated region
        $region21: #{linears_with_masks_forward.1} parent=19 // pred_check
          %p236 = pneg %p69
        $region22: #{linears_with_masks_forward.1} parent=19 // pred_check_branch
          %238 = sbr.rel (%p236) target = $region24
        $region23: #{linears_with_masks_forward.1} parent=19 // pred_region
          %p239 = scmp.lt.s32.totalorder %s24, 1
          %s240 = scalar_select %p239, %s24, 1
          %s241 = smul.addr %s240, 8
          %s242 = scalar_lea.vmem %s1, %s241
        $region24: #{linears_with_masks_forward.1} parent=19 // pred_fallthru
          _
        // Predicated region
        $region25: #{linears_with_masks_forward.1} parent=19 // pred_check
          %p243 = pneg %p95
        $region26: #{linears_with_masks_forward.1} parent=19 // pred_check_branch
          %245 = sbr.rel (%p243) target = $region28
        $region27: #{linears_with_masks_forward.1} parent=19 // pred_region
          %s246 = sand.u32 %s85, 1
          %s247 = sand.u32 %s85, 1
          %s248 = smul.addr %s247, 256
          %s249 = scalar_lea.vmem [#allocation7], %s248
          %s250 = smul.u32 2, %s23
          %s251 = smul.addr %s250, 8
          %s252 = scalar_lea.vmem %s2, %s251
          // Predicated region
          $region29: #{linears_with_masks_forward.1} parent=27 // pred_check
            _
          $region30: #{linears_with_masks_forward.1} parent=27 // pred_check_branch
            %254 = sbr.rel (0) target = $region32
          $region31: #{linears_with_masks_forward.1} parent=27 // pred_region
            // Predicated region
            $region33: #{linears_with_masks_forward.1} parent=31 // pred_check
              _
            $region34: #{linears_with_masks_forward.1} parent=31 // pred_check_branch
              %256 = sbr.rel (0) target = $region36
            $region35: #{linears_with_masks_forward.1} parent=31 // pred_region
              loop: start=0, step=1, limit=1
              $region37: #{linears_with_masks_forward.1} parent=35 // loop_pre_header
                _
              $region38: #{linears_with_masks_forward.1} parent=35 // loop_header
                %s258 = sphi 0, %s262
                %p259 = scmp.ge.s32.totalorder %s258, 1
                %s263 = sphi %s252, %s252
                %s264 = sphi %s249, %s249
              $region39: #{linears_with_masks_forward.1} parent=35 // loop_header_branch
                %261 = sbr.rel (%p259) target = $region43
              $region40: #{linears_with_masks_forward.1} parent=35 // loop_body
                %v265 = vld [vmem:[%s263] sm:$0xff]
                %266 = vst [vmem:[%s264] sm:$0xff] %v265
                %v267 = vld [vmem:[%s263 + $0x8] sm:$0xff]
                %268 = vst [vmem:[%s264 + $0x8] sm:$0xff] %v267
                %v269 = vld [vmem:[%s263 + $0x20] sm:$0xff]
                %270 = vst [vmem:[%s264 + $0x10] sm:$0xff] %v269
                %v271 = vld [vmem:[%s263 + $0x28] sm:$0xff]
                %272 = vst [vmem:[%s264 + $0x18] sm:$0xff] %v271
                %v273 = vld [vmem:[%s263 + $0x40] sm:$0xff]
                %274 = vst [vmem:[%s264 + $0x20] sm:$0xff] %v273
                %v275 = vld [vmem:[%s263 + $0x48] sm:$0xff]
                %276 = vst [vmem:[%s264 + $0x28] sm:$0xff] %v275
                %v277 = vld [vmem:[%s263 + $0x60] sm:$0xff]
                %278 = vst [vmem:[%s264 + $0x30] sm:$0xff] %v277
                %v279 = vld [vmem:[%s263 + $0x68] sm:$0xff]
                %280 = vst [vmem:[%s264 + $0x38] sm:$0xff] %v279
                %v281 = vld [vmem:[%s263 + $0x80] sm:$0xff]
                %282 = vst [vmem:[%s264 + $0x40] sm:$0xff] %v281
                %v283 = vld [vmem:[%s263 + $0x88] sm:$0xff]
                %284 = vst [vmem:[%s264 + $0x48] sm:$0xff] %v283
                %v285 = vld [vmem:[%s263 + $0xa0] sm:$0xff]
                %286 = vst [vmem:[%s264 + $0x50] sm:$0xff] %v285
                %v287 = vld [vmem:[%s263 + $0xa8] sm:$0xff]
                %288 = vst [vmem:[%s264 + $0x58] sm:$0xff] %v287
                %v289 = vld [vmem:[%s263 + $0xc0] sm:$0xff]
                %290 = vst [vmem:[%s264 + $0x60] sm:$0xff] %v289
                %v291 = vld [vmem:[%s263 + $0xc8] sm:$0xff]
                %292 = vst [vmem:[%s264 + $0x68] sm:$0xff] %v291
                %v293 = vld [vmem:[%s263 + $0xe0] sm:$0xff]
                %294 = vst [vmem:[%s264 + $0x70] sm:$0xff] %v293
                %v295 = vld [vmem:[%s263 + $0xe8] sm:$0xff]
                %296 = vst [vmem:[%s264 + $0x78] sm:$0xff] %v295
                %v297 = vld [vmem:[%s263 + $0x100] sm:$0xff]
                %298 = vst [vmem:[%s264 + $0x80] sm:$0xff] %v297
                %v299 = vld [vmem:[%s263 + $0x108] sm:$0xff]
                %300 = vst [vmem:[%s264 + $0x88] sm:$0xff] %v299
                %v301 = vld [vmem:[%s263 + $0x120] sm:$0xff]
                %302 = vst [vmem:[%s264 + $0x90] sm:$0xff] %v301
                %v303 = vld [vmem:[%s263 + $0x128] sm:$0xff]
                %304 = vst [vmem:[%s264 + $0x98] sm:$0xff] %v303
                %v305 = vld [vmem:[%s263 + $0x140] sm:$0xff]
                %306 = vst [vmem:[%s264 + $0xa0] sm:$0xff] %v305
                %v307 = vld [vmem:[%s263 + $0x148] sm:$0xff]
                %308 = vst [vmem:[%s264 + $0xa8] sm:$0xff] %v307
                %v309 = vld [vmem:[%s263 + $0x160] sm:$0xff]
                %310 = vst [vmem:[%s264 + $0xb0] sm:$0xff] %v309
                %v311 = vld [vmem:[%s263 + $0x168] sm:$0xff]
                %312 = vst [vmem:[%s264 + $0xb8] sm:$0xff] %v311
                %v313 = vld [vmem:[%s263 + $0x180] sm:$0xff]
                %314 = vst [vmem:[%s264 + $0xc0] sm:$0xff] %v313
                %v315 = vld [vmem:[%s263 + $0x188] sm:$0xff]
                %316 = vst [vmem:[%s264 + $0xc8] sm:$0xff] %v315
                %v317 = vld [vmem:[%s263 + $0x1a0] sm:$0xff]
                %318 = vst [vmem:[%s264 + $0xd0] sm:$0xff] %v317
                %v319 = vld [vmem:[%s263 + $0x1a8] sm:$0xff]
                %320 = vst [vmem:[%s264 + $0xd8] sm:$0xff] %v319
                %v321 = vld [vmem:[%s263 + $0x1c0] sm:$0xff]
                %322 = vst [vmem:[%s264 + $0xe0] sm:$0xff] %v321
                %v323 = vld [vmem:[%s263 + $0x1c8] sm:$0xff]
                %324 = vst [vmem:[%s264 + $0xe8] sm:$0xff] %v323
                %v325 = vld [vmem:[%s263 + $0x1e0] sm:$0xff]
                %326 = vst [vmem:[%s264 + $0xf0] sm:$0xff] %v325
                %v327 = vld [vmem:[%s263 + $0x1e8] sm:$0xff]
                %328 = vst [vmem:[%s264 + $0xf8] sm:$0xff] %v327
              $region41: #{linears_with_masks_forward.1} parent=35 // loop_footer
                %s262 = sadd.s32 1, %s258
              $region42: #{linears_with_masks_forward.1} parent=35 // loop_footer_branch
                %257 = sbr.rel target = $region38
              $region43: #{linears_with_masks_forward.1} parent=35 // loop_exit
                _
            $region36: #{linears_with_masks_forward.1} parent=31 // pred_fallthru
              _
            // Predicated region
            $region44: #{linears_with_masks_forward.1} parent=31 // pred_check
              _
            $region45: #{linears_with_masks_forward.1} parent=31 // pred_check_branch
              %330 = sbr.rel target = $region47
            $region46: #{linears_with_masks_forward.1} parent=31 // pred_region
              _
            $region47: #{linears_with_masks_forward.1} parent=31 // pred_fallthru
              _
          $region32: #{linears_with_masks_forward.1} parent=27 // pred_fallthru
            _
          %331 = vnop
        $region28: #{linears_with_masks_forward.1} parent=19 // pred_fallthru
          _
        // Predicated region
        $region48: #{linears_with_masks_forward.1} parent=19 // pred_check
          %p332 = pneg %p121
        $region49: #{linears_with_masks_forward.1} parent=19 // pred_check_branch
          %334 = sbr.rel (%p332) target = $region51
        $region50: #{linears_with_masks_forward.1} parent=19 // pred_region
          %s335 = sand.u32 %s111, 1
          %s336 = sand.u32 %s111, 1
          %s337 = smul.addr %s336, 256
          %s338 = scalar_lea.vmem [#allocation8], %s337
          %s339 = smul.u32 2, %s23
          %s340 = smul.addr %s339, 8
          %s341 = scalar_lea.vmem %s3, %s340
          // Predicated region
          $region52: #{linears_with_masks_forward.1} parent=50 // pred_check
            _
          $region53: #{linears_with_masks_forward.1} parent=50 // pred_check_branch
            %343 = sbr.rel (0) target = $region55
          $region54: #{linears_with_masks_forward.1} parent=50 // pred_region
            // Predicated region
            $region56: #{linears_with_masks_forward.1} parent=54 // pred_check
              _
            $region57: #{linears_with_masks_forward.1} parent=54 // pred_check_branch
              %345 = sbr.rel (0) target = $region59
            $region58: #{linears_with_masks_forward.1} parent=54 // pred_region
              loop: start=0, step=1, limit=1
              $region60: #{linears_with_masks_forward.1} parent=58 // loop_pre_header
                _
              $region61: #{linears_with_masks_forward.1} parent=58 // loop_header
                %s347 = sphi 0, %s351
                %p348 = scmp.ge.s32.totalorder %s347, 1
                %s352 = sphi %s341, %s341
                %s353 = sphi %s338, %s338
              $region62: #{linears_with_masks_forward.1} parent=58 // loop_header_branch
                %350 = sbr.rel (%p348) target = $region66
              $region63: #{linears_with_masks_forward.1} parent=58 // loop_body
                %v354 = vld [vmem:[%s352] sm:$0xff]
                %355 = vst [vmem:[%s353] sm:$0xff] %v354
                %v356 = vld [vmem:[%s352 + $0x8] sm:$0xff]
                %357 = vst [vmem:[%s353 + $0x8] sm:$0xff] %v356
                %v358 = vld [vmem:[%s352 + $0x20] sm:$0xff]
                %359 = vst [vmem:[%s353 + $0x10] sm:$0xff] %v358
                %v360 = vld [vmem:[%s352 + $0x28] sm:$0xff]
                %361 = vst [vmem:[%s353 + $0x18] sm:$0xff] %v360
                %v362 = vld [vmem:[%s352 + $0x40] sm:$0xff]
                %363 = vst [vmem:[%s353 + $0x20] sm:$0xff] %v362
                %v364 = vld [vmem:[%s352 + $0x48] sm:$0xff]
                %365 = vst [vmem:[%s353 + $0x28] sm:$0xff] %v364
                %v366 = vld [vmem:[%s352 + $0x60] sm:$0xff]
                %367 = vst [vmem:[%s353 + $0x30] sm:$0xff] %v366
                %v368 = vld [vmem:[%s352 + $0x68] sm:$0xff]
                %369 = vst [vmem:[%s353 + $0x38] sm:$0xff] %v368
                %v370 = vld [vmem:[%s352 + $0x80] sm:$0xff]
                %371 = vst [vmem:[%s353 + $0x40] sm:$0xff] %v370
                %v372 = vld [vmem:[%s352 + $0x88] sm:$0xff]
                %373 = vst [vmem:[%s353 + $0x48] sm:$0xff] %v372
                %v374 = vld [vmem:[%s352 + $0xa0] sm:$0xff]
                %375 = vst [vmem:[%s353 + $0x50] sm:$0xff] %v374
                %v376 = vld [vmem:[%s352 + $0xa8] sm:$0xff]
                %377 = vst [vmem:[%s353 + $0x58] sm:$0xff] %v376
                %v378 = vld [vmem:[%s352 + $0xc0] sm:$0xff]
                %379 = vst [vmem:[%s353 + $0x60] sm:$0xff] %v378
                %v380 = vld [vmem:[%s352 + $0xc8] sm:$0xff]
                %381 = vst [vmem:[%s353 + $0x68] sm:$0xff] %v380
                %v382 = vld [vmem:[%s352 + $0xe0] sm:$0xff]
                %383 = vst [vmem:[%s353 + $0x70] sm:$0xff] %v382
                %v384 = vld [vmem:[%s352 + $0xe8] sm:$0xff]
                %385 = vst [vmem:[%s353 + $0x78] sm:$0xff] %v384
                %v386 = vld [vmem:[%s352 + $0x100] sm:$0xff]
                %387 = vst [vmem:[%s353 + $0x80] sm:$0xff] %v386
                %v388 = vld [vmem:[%s352 + $0x108] sm:$0xff]
                %389 = vst [vmem:[%s353 + $0x88] sm:$0xff] %v388
                %v390 = vld [vmem:[%s352 + $0x120] sm:$0xff]
                %391 = vst [vmem:[%s353 + $0x90] sm:$0xff] %v390
                %v392 = vld [vmem:[%s352 + $0x128] sm:$0xff]
                %393 = vst [vmem:[%s353 + $0x98] sm:$0xff] %v392
                %v394 = vld [vmem:[%s352 + $0x140] sm:$0xff]
                %395 = vst [vmem:[%s353 + $0xa0] sm:$0xff] %v394
                %v396 = vld [vmem:[%s352 + $0x148] sm:$0xff]
                %397 = vst [vmem:[%s353 + $0xa8] sm:$0xff] %v396
                %v398 = vld [vmem:[%s352 + $0x160] sm:$0xff]
                %399 = vst [vmem:[%s353 + $0xb0] sm:$0xff] %v398
                %v400 = vld [vmem:[%s352 + $0x168] sm:$0xff]
                %401 = vst [vmem:[%s353 + $0xb8] sm:$0xff] %v400
                %v402 = vld [vmem:[%s352 + $0x180] sm:$0xff]
                %403 = vst [vmem:[%s353 + $0xc0] sm:$0xff] %v402
                %v404 = vld [vmem:[%s352 + $0x188] sm:$0xff]
                %405 = vst [vmem:[%s353 + $0xc8] sm:$0xff] %v404
                %v406 = vld [vmem:[%s352 + $0x1a0] sm:$0xff]
                %407 = vst [vmem:[%s353 + $0xd0] sm:$0xff] %v406
                %v408 = vld [vmem:[%s352 + $0x1a8] sm:$0xff]
                %409 = vst [vmem:[%s353 + $0xd8] sm:$0xff] %v408
                %v410 = vld [vmem:[%s352 + $0x1c0] sm:$0xff]
                %411 = vst [vmem:[%s353 + $0xe0] sm:$0xff] %v410
                %v412 = vld [vmem:[%s352 + $0x1c8] sm:$0xff]
                %413 = vst [vmem:[%s353 + $0xe8] sm:$0xff] %v412
                %v414 = vld [vmem:[%s352 + $0x1e0] sm:$0xff]
                %415 = vst [vmem:[%s353 + $0xf0] sm:$0xff] %v414
                %v416 = vld [vmem:[%s352 + $0x1e8] sm:$0xff]
                %417 = vst [vmem:[%s353 + $0xf8] sm:$0xff] %v416
              $region64: #{linears_with_masks_forward.1} parent=58 // loop_footer
                %s351 = sadd.s32 1, %s347
              $region65: #{linears_with_masks_forward.1} parent=58 // loop_footer_branch
                %346 = sbr.rel target = $region61
              $region66: #{linears_with_masks_forward.1} parent=58 // loop_exit
                _
            $region59: #{linears_with_masks_forward.1} parent=54 // pred_fallthru
              _
            // Predicated region
            $region67: #{linears_with_masks_forward.1} parent=54 // pred_check
              _
            $region68: #{linears_with_masks_forward.1} parent=54 // pred_check_branch
              %419 = sbr.rel target = $region70
            $region69: #{linears_with_masks_forward.1} parent=54 // pred_region
              _
            $region70: #{linears_with_masks_forward.1} parent=54 // pred_fallthru
              _
          $region55: #{linears_with_masks_forward.1} parent=50 // pred_fallthru
            _
          %420 = vnop
        $region51: #{linears_with_masks_forward.1} parent=19 // pred_fallthru
          _
        // Predicated region
        $region71: #{linears_with_masks_forward.1} parent=19 // pred_check
          %p421 = pneg %p147
        $region72: #{linears_with_masks_forward.1} parent=19 // pred_check_branch
          %423 = sbr.rel (%p421) target = $region74
        $region73: #{linears_with_masks_forward.1} parent=19 // pred_region
          %s424 = smul.u32 2, %s23
          %p425 = scmp.lt.s32.totalorder %s424, 3
          %s426 = scalar_select %p425, %s424, 3
          %s427 = scalar_lea.vmem %s4, %s426
          %s428 = smul.u32 2, %s23
        $region74: #{linears_with_masks_forward.1} parent=19 // pred_fallthru
          _
        // Predicated region
        $region75: #{linears_with_masks_forward.1} parent=19 // pred_check
          %p429 = pneg %p173
        $region76: #{linears_with_masks_forward.1} parent=19 // pred_check_branch
          %431 = sbr.rel (%p429) target = $region78
        $region77: #{linears_with_masks_forward.1} parent=19 // pred_region
          %s432 = smul.u32 2, %s23
          %p433 = scmp.lt.s32.totalorder %s432, 3
          %s434 = scalar_select %p433, %s432, 3
          %s435 = scalar_lea.vmem %s5, %s434
          %s436 = smul.u32 2, %s23
        $region78: #{linears_with_masks_forward.1} parent=19 // pred_fallthru
          _
      $region20: #{linears_with_masks_forward.1} parent=5 // pred_fallthru
        _
      %p437 = scmp.le.s32.totalorder 1, %s16
      %p438 = scmp.lt.s32.totalorder %s16, 5
      %p439 = pnand %p437, %p438
      %p440 = pneg %p439
      // Predicated region
      $region79: #{linears_with_masks_forward.1} parent=5 // pred_check
        _
      $region80: #{linears_with_masks_forward.1} parent=5 // pred_check_branch
        %442 = sbr.rel (%p439) target = $region82
      $region81: #{linears_with_masks_forward.1} parent=5 // pred_region
        %s443 = ssub.s32 %s16, 1
        // Predicated region
        $region83: #{linears_with_masks_forward.1} parent=81 // pred_check
          %p444 = pneg %p49
        $region84: #{linears_with_masks_forward.1} parent=81 // pred_check_branch
          %446 = sbr.rel (%p444) target = $region86
        $region85: #{linears_with_masks_forward.1} parent=81 // pred_region
          %448 = dma.done [#allocation6], 16
        $region86: #{linears_with_masks_forward.1} parent=81 // pred_fallthru
          _
        %s449 = sand.u32 %s88, 1
        %s450 = sand.u32 %s88, 1
        %s451 = smul.addr %s450, 256
        %s452 = scalar_lea.vmem [#allocation7], %s451
        // Predicated region
        $region87: #{linears_with_masks_forward.1} parent=81 // pred_check
          %p453 = pneg %p101
        $region88: #{linears_with_masks_forward.1} parent=81 // pred_check_branch
          %455 = sbr.rel (%p453) target = $region90
        $region89: #{linears_with_masks_forward.1} parent=81 // pred_region
          _
        $region90: #{linears_with_masks_forward.1} parent=81 // pred_fallthru
          _
        %s456 = sand.u32 %s114, 1
        %s457 = sand.u32 %s114, 1
        %s458 = smul.addr %s457, 256
        %s459 = scalar_lea.vmem [#allocation8], %s458
        // Predicated region
        $region91: #{linears_with_masks_forward.1} parent=81 // pred_check
          %p460 = pneg %p127
        $region92: #{linears_with_masks_forward.1} parent=81 // pred_check_branch
          %462 = sbr.rel (%p460) target = $region94
        $region93: #{linears_with_masks_forward.1} parent=81 // pred_region
          _
        $region94: #{linears_with_masks_forward.1} parent=81 // pred_fallthru
          _
        %463 = sfence
        %p464 = pneg %p49
        %p465 = pneg %p46
        %p466 = scmp.lt.s32.totalorder %s26, 1
        %s467 = scalar_select %p466, %s26, 1
        %s468 = smul.addr %s467, 8
        %s469 = scalar_lea.vmem %s1, %s468
        %p470 = pneg %p75
        %p471 = pneg %p72
        %s472 = sand.u32 %s88, 1
        %s473 = sand.u32 %s88, 1
        %s474 = smul.addr %s473, 256
        %s475 = scalar_lea.vmem [#allocation7], %s474
        %p476 = pneg %p101
        %p477 = pneg %p98
        %s478 = sand.u32 %s114, 1
        %s479 = sand.u32 %s114, 1
        %s480 = smul.addr %s479, 256
        %s481 = scalar_lea.vmem [#allocation8], %s480
        %p482 = pneg %p127
        %p483 = pneg %p124
        %s484 = smul.u32 2, %s25
        %p485 = scmp.lt.s32.totalorder %s484, 3
        %s486 = scalar_select %p485, %s484, 3
        %s487 = scalar_lea.vmem %s4, %s486
        %p488 = pneg %p153
        %p489 = pneg %p150
        %s490 = smul.u32 2, %s25
        %p491 = scmp.lt.s32.totalorder %s490, 3
        %s492 = scalar_select %p491, %s490, 3
        %s493 = scalar_lea.vmem %s5, %s492
        %p494 = pneg %p179
        %p495 = pneg %p176
        %p496 = pneg %p207
        %p497 = pneg %p204
        %s498 = sand.u32 %s194, 1
        %s499 = scalar_lea.sflag [#allocation5], %s498
        %s500 = sand.u32 %s194, 1
        %s501 = smul.addr %s500, 16
        %s502 = scalar_lea.vmem [#allocation9], %s501
        %p503 = scmp.lt.s32.totalorder %s26, 1
        %s504 = scalar_select %p503, %s26, 1
        %s505 = smul.addr %s504, 8
        %s506 = scalar_lea.vmem %s1, %s505
        %s507 = smul.u32 2, %s25
        %s508 = smul.u32 2, %s25
        %s509 = smul.u32 2, %s25
        %p510 = scmp.lt.s32.totalorder %s509, 3
        %s511 = scalar_select %p510, %s509, 3
        %s512 = scalar_lea.vmem %s4, %s511
        %s513 = smul.u32 2, %s25
        %s514 = smul.u32 2, %s25
        %p515 = scmp.lt.s32.totalorder %s514, 3
        %s516 = scalar_select %p515, %s514, 3
        %s517 = scalar_lea.vmem %s5, %s516
        %s518 = smul.u32 2, %s25
        %s519 = smul.u32 2, %s25
        %p520 = scmp.eq.s32.totalorder %s26, 0
        // Predicated region
        $region95: #{linears_with_masks_forward.1} parent=81 // pred_check
          %p521 = pneg %p520
        $region96: #{linears_with_masks_forward.1} parent=81 // pred_check_branch
          %523 = sbr.rel (%p521) target = $region98
        $region97: #{linears_with_masks_forward.1} parent=81 // pred_region
          %s524 = sld [smem:[#allocation4]]
          %v525 = vld [vmem:[%s452] sm:$0xff]
          %v526 = vld [vmem:[%s452 + $0x8] sm:$0xff]
          %v527 = vld [vmem:[%s452 + $0x10] sm:$0xff]
          %v528 = vld [vmem:[%s452 + $0x18] sm:$0xff]
          %v529 = vld [vmem:[%s452 + $0x20] sm:$0xff]
          %v530 = vld [vmem:[%s452 + $0x28] sm:$0xff]
          %v531 = vld [vmem:[%s452 + $0x30] sm:$0xff]
          %v532 = vld [vmem:[%s452 + $0x38] sm:$0xff]
          %v533 = vld [vmem:[%s452 + $0x40] sm:$0xff]
          %v534 = vld [vmem:[%s452 + $0x48] sm:$0xff]
          %v535 = vld [vmem:[%s452 + $0x50] sm:$0xff]
          %v536 = vld [vmem:[%s452 + $0x58] sm:$0xff]
          %v537 = vld [vmem:[%s452 + $0x60] sm:$0xff]
          %v538 = vld [vmem:[%s452 + $0x68] sm:$0xff]
          %v539 = vld [vmem:[%s452 + $0x70] sm:$0xff]
          %v540 = vld [vmem:[%s452 + $0x78] sm:$0xff]
          %v541 = vld [vmem:[%s452 + $0x80] sm:$0xff]
          %v542 = vld [vmem:[%s452 + $0x88] sm:$0xff]
          %v543 = vld [vmem:[%s452 + $0x90] sm:$0xff]
          %v544 = vld [vmem:[%s452 + $0x98] sm:$0xff]
          %v545 = vld [vmem:[%s452 + $0xa0] sm:$0xff]
          %v546 = vld [vmem:[%s452 + $0xa8] sm:$0xff]
          %v547 = vld [vmem:[%s452 + $0xb0] sm:$0xff]
          %v548 = vld [vmem:[%s452 + $0xb8] sm:$0xff]
          %v549 = vld [vmem:[%s452 + $0xc0] sm:$0xff]
          %v550 = vld [vmem:[%s452 + $0xc8] sm:$0xff]
          %v551 = vld [vmem:[%s452 + $0xd0] sm:$0xff]
          %v552 = vld [vmem:[%s452 + $0xd8] sm:$0xff]
          %v553 = vld [vmem:[%s452 + $0xe0] sm:$0xff]
          %v554 = vld [vmem:[%s452 + $0xe8] sm:$0xff]
          %v555 = vld [vmem:[%s452 + $0xf0] sm:$0xff]
          %v556 = vld [vmem:[%s452 + $0xf8] sm:$0xff]
          %v557 = vstv %s524
          %v558 = vmul.f32 %v557, %v525
          %v559 = vmul.f32 %v557, %v526
          %v560 = vmul.f32 %v557, %v527
          %v561 = vmul.f32 %v557, %v528
          %v562 = vmul.f32 %v557, %v529
          %v563 = vmul.f32 %v557, %v530
          %v564 = vmul.f32 %v557, %v531
          %v565 = vmul.f32 %v557, %v532
          %v566 = vmul.f32 %v557, %v533
          %v567 = vmul.f32 %v557, %v534
          %v568 = vmul.f32 %v557, %v535
          %v569 = vmul.f32 %v557, %v536
          %v570 = vmul.f32 %v557, %v537
          %v571 = vmul.f32 %v557, %v538
          %v572 = vmul.f32 %v557, %v539
          %v573 = vmul.f32 %v557, %v540
          %v574 = vmul.f32 %v557, %v541
          %v575 = vmul.f32 %v557, %v542
          %v576 = vmul.f32 %v557, %v543
          %v577 = vmul.f32 %v557, %v544
          %v578 = vmul.f32 %v557, %v545
          %v579 = vmul.f32 %v557, %v546
          %v580 = vmul.f32 %v557, %v547
          %v581 = vmul.f32 %v557, %v548
          %v582 = vmul.f32 %v557, %v549
          %v583 = vmul.f32 %v557, %v550
          %v584 = vmul.f32 %v557, %v551
          %v585 = vmul.f32 %v557, %v552
          %v586 = vmul.f32 %v557, %v553
          %v587 = vmul.f32 %v557, %v554
          %v588 = vmul.f32 %v557, %v555
          %v589 = vmul.f32 %v557, %v556
          %s590 = sld [smem:[#allocation4 + $0x1]]
          %v591 = vld [vmem:[%s459] sm:$0xff]
          %v592 = vld [vmem:[%s459 + $0x8] sm:$0xff]
          %v593 = vld [vmem:[%s459 + $0x10] sm:$0xff]
          %v594 = vld [vmem:[%s459 + $0x18] sm:$0xff]
          %v595 = vld [vmem:[%s459 + $0x20] sm:$0xff]
          %v596 = vld [vmem:[%s459 + $0x28] sm:$0xff]
          %v597 = vld [vmem:[%s459 + $0x30] sm:$0xff]
          %v598 = vld [vmem:[%s459 + $0x38] sm:$0xff]
          %v599 = vld [vmem:[%s459 + $0x40] sm:$0xff]
          %v600 = vld [vmem:[%s459 + $0x48] sm:$0xff]
          %v601 = vld [vmem:[%s459 + $0x50] sm:$0xff]
          %v602 = vld [vmem:[%s459 + $0x58] sm:$0xff]
          %v603 = vld [vmem:[%s459 + $0x60] sm:$0xff]
          %v604 = vld [vmem:[%s459 + $0x68] sm:$0xff]
          %v605 = vld [vmem:[%s459 + $0x70] sm:$0xff]
          %v606 = vld [vmem:[%s459 + $0x78] sm:$0xff]
          %v607 = vld [vmem:[%s459 + $0x80] sm:$0xff]
          %v608 = vld [vmem:[%s459 + $0x88] sm:$0xff]
          %v609 = vld [vmem:[%s459 + $0x90] sm:$0xff]
          %v610 = vld [vmem:[%s459 + $0x98] sm:$0xff]
          %v611 = vld [vmem:[%s459 + $0xa0] sm:$0xff]
          %v612 = vld [vmem:[%s459 + $0xa8] sm:$0xff]
          %v613 = vld [vmem:[%s459 + $0xb0] sm:$0xff]
          %v614 = vld [vmem:[%s459 + $0xb8] sm:$0xff]
          %v615 = vld [vmem:[%s459 + $0xc0] sm:$0xff]
          %v616 = vld [vmem:[%s459 + $0xc8] sm:$0xff]
          %v617 = vld [vmem:[%s459 + $0xd0] sm:$0xff]
          %v618 = vld [vmem:[%s459 + $0xd8] sm:$0xff]
          %v619 = vld [vmem:[%s459 + $0xe0] sm:$0xff]
          %v620 = vld [vmem:[%s459 + $0xe8] sm:$0xff]
          %v621 = vld [vmem:[%s459 + $0xf0] sm:$0xff]
          %v622 = vld [vmem:[%s459 + $0xf8] sm:$0xff]
          %v623 = vstv %s590
          %v624 = vmul.f32 %v623, %v591
          %v625 = vmul.f32 %v623, %v592
          %v626 = vmul.f32 %v623, %v593
          %v627 = vmul.f32 %v623, %v594
          %v628 = vmul.f32 %v623, %v595
          %v629 = vmul.f32 %v623, %v596
          %v630 = vmul.f32 %v623, %v597
          %v631 = vmul.f32 %v623, %v598
          %v632 = vmul.f32 %v623, %v599
          %v633 = vmul.f32 %v623, %v600
          %v634 = vmul.f32 %v623, %v601
          %v635 = vmul.f32 %v623, %v602
          %v636 = vmul.f32 %v623, %v603
          %v637 = vmul.f32 %v623, %v604
          %v638 = vmul.f32 %v623, %v605
          %v639 = vmul.f32 %v623, %v606
          %v640 = vmul.f32 %v623, %v607
          %v641 = vmul.f32 %v623, %v608
          %v642 = vmul.f32 %v623, %v609
          %v643 = vmul.f32 %v623, %v610
          %v644 = vmul.f32 %v623, %v611
          %v645 = vmul.f32 %v623, %v612
          %v646 = vmul.f32 %v623, %v613
          %v647 = vmul.f32 %v623, %v614
          %v648 = vmul.f32 %v623, %v615
          %v649 = vmul.f32 %v623, %v616
          %v650 = vmul.f32 %v623, %v617
          %v651 = vmul.f32 %v623, %v618
          %v652 = vmul.f32 %v623, %v619
          %v653 = vmul.f32 %v623, %v620
          %v654 = vmul.f32 %v623, %v621
          %v655 = vmul.f32 %v623, %v622
          %v656 = vadd.f32 %v558, %v624
          %v657 = vadd.f32 %v559, %v625
          %v658 = vadd.f32 %v560, %v626
          %v659 = vadd.f32 %v561, %v627
          %v660 = vadd.f32 %v562, %v628
          %v661 = vadd.f32 %v563, %v629
          %v662 = vadd.f32 %v564, %v630
          %v663 = vadd.f32 %v565, %v631
          %v664 = vadd.f32 %v566, %v632
          %v665 = vadd.f32 %v567, %v633
          %v666 = vadd.f32 %v568, %v634
          %v667 = vadd.f32 %v569, %v635
          %v668 = vadd.f32 %v570, %v636
          %v669 = vadd.f32 %v571, %v637
          %v670 = vadd.f32 %v572, %v638
          %v671 = vadd.f32 %v573, %v639
          %v672 = vadd.f32 %v574, %v640
          %v673 = vadd.f32 %v575, %v641
          %v674 = vadd.f32 %v576, %v642
          %v675 = vadd.f32 %v577, %v643
          %v676 = vadd.f32 %v578, %v644
          %v677 = vadd.f32 %v579, %v645
          %v678 = vadd.f32 %v580, %v646
          %v679 = vadd.f32 %v581, %v647
          %v680 = vadd.f32 %v582, %v648
          %v681 = vadd.f32 %v583, %v649
          %v682 = vadd.f32 %v584, %v650
          %v683 = vadd.f32 %v585, %v651
          %v684 = vadd.f32 %v586, %v652
          %v685 = vadd.f32 %v587, %v653
          %v686 = vadd.f32 %v588, %v654
          %v687 = vadd.f32 %v589, %v655
          %688 = vst [vmem:[#allocation2] sm:$0xff] %v656
          %689 = vst [vmem:[#allocation2 + $0x8] sm:$0xff] %v657
          %690 = vst [vmem:[#allocation2 + $0x10] sm:$0xff] %v658
          %691 = vst [vmem:[#allocation2 + $0x18] sm:$0xff] %v659
          %692 = vst [vmem:[#allocation2 + $0x20] sm:$0xff] %v660
          %693 = vst [vmem:[#allocation2 + $0x28] sm:$0xff] %v661
          %694 = vst [vmem:[#allocation2 + $0x30] sm:$0xff] %v662
          %695 = vst [vmem:[#allocation2 + $0x38] sm:$0xff] %v663
          %696 = vst [vmem:[#allocation2 + $0x40] sm:$0xff] %v664
          %697 = vst [vmem:[#allocation2 + $0x48] sm:$0xff] %v665
          %698 = vst [vmem:[#allocation2 + $0x50] sm:$0xff] %v666
          %699 = vst [vmem:[#allocation2 + $0x58] sm:$0xff] %v667
          %700 = vst [vmem:[#allocation2 + $0x60] sm:$0xff] %v668
          %701 = vst [vmem:[#allocation2 + $0x68] sm:$0xff] %v669
          %702 = vst [vmem:[#allocation2 + $0x70] sm:$0xff] %v670
          %703 = vst [vmem:[#allocation2 + $0x78] sm:$0xff] %v671
          %704 = vst [vmem:[#allocation2 + $0x80] sm:$0xff] %v672
          %705 = vst [vmem:[#allocation2 + $0x88] sm:$0xff] %v673
          %706 = vst [vmem:[#allocation2 + $0x90] sm:$0xff] %v674
          %707 = vst [vmem:[#allocation2 + $0x98] sm:$0xff] %v675
          %708 = vst [vmem:[#allocation2 + $0xa0] sm:$0xff] %v676
          %709 = vst [vmem:[#allocation2 + $0xa8] sm:$0xff] %v677
          %710 = vst [vmem:[#allocation2 + $0xb0] sm:$0xff] %v678
          %711 = vst [vmem:[#allocation2 + $0xb8] sm:$0xff] %v679
          %712 = vst [vmem:[#allocation2 + $0xc0] sm:$0xff] %v680
          %713 = vst [vmem:[#allocation2 + $0xc8] sm:$0xff] %v681
          %714 = vst [vmem:[#allocation2 + $0xd0] sm:$0xff] %v682
          %715 = vst [vmem:[#allocation2 + $0xd8] sm:$0xff] %v683
          %716 = vst [vmem:[#allocation2 + $0xe0] sm:$0xff] %v684
          %717 = vst [vmem:[#allocation2 + $0xe8] sm:$0xff] %v685
          %718 = vst [vmem:[#allocation2 + $0xf0] sm:$0xff] %v686
          %719 = vst [vmem:[#allocation2 + $0xf8] sm:$0xff] %v687
          %s720 = sld [smem:[#allocation4 + $0x2]]
          %v721 = vld [vmem:[%s512] sm:$0x3]
          %v722 = vstv %s720
          %v723 = vmul.f32 %v722, %v721
          %s724 = sld [smem:[#allocation4 + $0x3]]
          %v725 = vld [vmem:[%s517] sm:$0x3]
          %v726 = vstv %s724
          %v727 = vmul.f32 %v726, %v725
          %v728 = vadd.f32 %v723, %v727
          %v729 = vlaneseq
          %vm730 = vcmp.ge.s32.totalorder %v729, 0
          %vm731 = vcmp.lt.s32.totalorder %v729, 256
          %vm732 = vmand %vm730, %vm731
          %733 = vst.msk [vmem:[#allocation3] sm:$0x3] %vm732, %v728
        $region98: #{linears_with_masks_forward.1} parent=81 // pred_fallthru
          _
        %v734 = vld [vmem:[%s506] sm:$0xff]
        %v735 = vld [vmem:[#allocation2] sm:$0xff]
        %v736 = vld [vmem:[#allocation2 + $0x8] sm:$0xff]
        %v737 = vld [vmem:[#allocation2 + $0x10] sm:$0xff]
        %v738 = vld [vmem:[#allocation2 + $0x18] sm:$0xff]
        %v739 = vld [vmem:[#allocation2 + $0x20] sm:$0xff]
        %v740 = vld [vmem:[#allocation2 + $0x28] sm:$0xff]
        %v741 = vld [vmem:[#allocation2 + $0x30] sm:$0xff]
        %v742 = vld [vmem:[#allocation2 + $0x38] sm:$0xff]
        %v743 = vld [vmem:[#allocation2 + $0x40] sm:$0xff]
        %v744 = vld [vmem:[#allocation2 + $0x48] sm:$0xff]
        %v745 = vld [vmem:[#allocation2 + $0x50] sm:$0xff]
        %v746 = vld [vmem:[#allocation2 + $0x58] sm:$0xff]
        %v747 = vld [vmem:[#allocation2 + $0x60] sm:$0xff]
        %v748 = vld [vmem:[#allocation2 + $0x68] sm:$0xff]
        %v749 = vld [vmem:[#allocation2 + $0x70] sm:$0xff]
        %v750 = vld [vmem:[#allocation2 + $0x78] sm:$0xff]
        %v751 = vld [vmem:[#allocation2 + $0x80] sm:$0xff]
        %v752 = vld [vmem:[#allocation2 + $0x88] sm:$0xff]
        %v753 = vld [vmem:[#allocation2 + $0x90] sm:$0xff]
        %v754 = vld [vmem:[#allocation2 + $0x98] sm:$0xff]
        %v755 = vld [vmem:[#allocation2 + $0xa0] sm:$0xff]
        %v756 = vld [vmem:[#allocation2 + $0xa8] sm:$0xff]
        %v757 = vld [vmem:[#allocation2 + $0xb0] sm:$0xff]
        %v758 = vld [vmem:[#allocation2 + $0xb8] sm:$0xff]
        %v759 = vld [vmem:[#allocation2 + $0xc0] sm:$0xff]
        %v760 = vld [vmem:[#allocation2 + $0xc8] sm:$0xff]
        %v761 = vld [vmem:[#allocation2 + $0xd0] sm:$0xff]
        %v762 = vld [vmem:[#allocation2 + $0xd8] sm:$0xff]
        %v763 = vld [vmem:[#allocation2 + $0xe0] sm:$0xff]
        %v764 = vld [vmem:[#allocation2 + $0xe8] sm:$0xff]
        %v765 = vld [vmem:[#allocation2 + $0xf0] sm:$0xff]
        %v766 = vld [vmem:[#allocation2 + $0xf8] sm:$0xff]
        %v767 = vld [vmem:[#allocation3] sm:$0x3]
        %v769 = vperm.slane %v767, 0
        %v770 = vperm.slane %v767, 1
        %773 = vmatpush.msra.mxu0 %v765
        %774 = vmatpush.msra.mxu0 %v763
        %775 = vmatpush.msra.mxu0 %v761
        %776 = vmatpush.msra.mxu0 %v759
        %777 = vmatpush.msra.mxu0 %v757
        %778 = vmatpush.msra.mxu0 %v755
        %779 = vmatpush.msra.mxu0 %v753
        %780 = vmatpush.msra.mxu0 %v751
        %781 = vmatpush.msra.mxu0 %v749
        %782 = vmatpush.msra.mxu0 %v747
        %783 = vmatpush.msra.mxu0 %v745
        %784 = vmatpush.msra.mxu0 %v743
        %785 = vmatpush.msra.mxu0 %v741
        %786 = vmatpush.msra.mxu0 %v739
        %787 = vmatpush.msra.mxu0 %v737
        %788 = vmatpush.msra.mxu0 %v735
        %789 = vmatmul.f32.gmra.mxu0 %v734
        %v790 = vpop.f32.mrf.mxu0
        %v791 = vadd.f32 %v769, %v790
        %792 = vdwg.mxu0
        %793 = vmatpush.msra.mxu0 %v766
        %794 = vmatpush.msra.mxu0 %v764
        %795 = vmatpush.msra.mxu0 %v762
        %796 = vmatpush.msra.mxu0 %v760
        %797 = vmatpush.msra.mxu0 %v758
        %798 = vmatpush.msra.mxu0 %v756
        %799 = vmatpush.msra.mxu0 %v754
        %800 = vmatpush.msra.mxu0 %v752
        %801 = vmatpush.msra.mxu0 %v750
        %802 = vmatpush.msra.mxu0 %v748
        %803 = vmatpush.msra.mxu0 %v746
        %804 = vmatpush.msra.mxu0 %v744
        %805 = vmatpush.msra.mxu0 %v742
        %806 = vmatpush.msra.mxu0 %v740
        %807 = vmatpush.msra.mxu0 %v738
        %808 = vmatpush.msra.mxu0 %v736
        %809 = vmatmul.f32.gmra.mxu0 %v734
        %v810 = vpop.f32.mrf.mxu0
        %v811 = vadd.f32 %v770, %v810
        %812 = vdwg.mxu0
        %813 = vst [vmem:[%s502] sm:$0xff] %v791
        %814 = vst [vmem:[%s502 + $0x8] sm:$0xff] %v811
        %s815 = sand.u32 %s194, 1
        %s816 = scalar_lea.sflag [#allocation5], %s815
        %s817 = sand.u32 %s194, 1
        %s818 = smul.addr %s817, 16
        %s819 = scalar_lea.vmem [#allocation9], %s818
        // Predicated region
        $region99: #{linears_with_masks_forward.1} parent=81 // pred_check
          %p820 = pneg %p204
        $region100: #{linears_with_masks_forward.1} parent=81 // pred_check_branch
          %822 = sbr.rel (%p820) target = $region102
        $region101: #{linears_with_masks_forward.1} parent=81 // pred_region
          %s823 = smul.u32 2, %s25
          %825 = vsyncadd %s816, 0
          %s826 = smul.addr %s26, 4
          %s827 = sadd.s32 %s823, %s826
          %s828 = smul.addr %s827, 8
          %s829 = scalar_lea.hbm %s6, %s828
          %s831 = sshll.u32 %s819, 4
          %s832 = int_to_ptr.vmem [resolvable:$true] %s831
          %s833 = sshll.u32 %s829, 4
          %s834 = int_to_ptr.hbm [resolvable:$true] %s833
          %836 = dma.vmem_to_hbm [thread:$0]  %s832, 256, %s834, %s816
        $region102: #{linears_with_masks_forward.1} parent=81 // pred_fallthru
          _
      $region82: #{linears_with_masks_forward.1} parent=5 // pred_fallthru
        _
      %p837 = scmp.le.s32.totalorder 2, %s16
      // Predicated region
      $region103: #{linears_with_masks_forward.1} parent=5 // pred_check
        %p838 = pneg %p837
      $region104: #{linears_with_masks_forward.1} parent=5 // pred_check_branch
        %840 = sbr.rel (%p838) target = $region106
      $region105: #{linears_with_masks_forward.1} parent=5 // pred_region
        %s841 = ssub.s32 %s16, 2
        // Predicated region
        $region107: #{linears_with_masks_forward.1} parent=105 // pred_check
          %p842 = pneg %p210
        $region108: #{linears_with_masks_forward.1} parent=105 // pred_check_branch
          %844 = sbr.rel (%p842) target = $region110
        $region109: #{linears_with_masks_forward.1} parent=105 // pred_region
          %s845 = sand.u32 %s195, 1
          %s846 = scalar_lea.sflag [#allocation5], %s845
          %s847 = sand.u32 %s195, 1
          %s848 = smul.addr %s847, 16
          %s849 = scalar_lea.vmem [#allocation9], %s848
          %851 = dma.done %s846, 256
        $region110: #{linears_with_masks_forward.1} parent=105 // pred_fallthru
          _
      $region106: #{linears_with_masks_forward.1} parent=5 // pred_fallthru
        _
    $region6: #{linears_with_masks_forward.1} parent=1 // loop_footer
      %s20 = sadd.s32 1, %s16
    $region7: #{linears_with_masks_forward.1} parent=1 // loop_footer_branch
      %15 = sbr.rel target = $region3
    $region8: #{linears_with_masks_forward.1} parent=1 // loop_exit
      _
    %852 = vsyncpa [#allocation5], 1
    %s853 = scalar_lea.sflag [#allocation5], 1
    %854 = vsyncpa %s853, 1
    %855 = vsyncpa [#allocation6], 1
    %s856 = scalar_lea.sflag [#allocation6], 1
    %857 = vsyncpa %s856, 1

</llo_original>
